<compile_context>
chip_gen: v7x
topology: tpu7x:2x2x1
jax: 0.10.0
libtpu: 0.0.40
codegen_flags: <defaults>
</compile_context>

<pallas_src>
import functools

import jax
import jax.numpy as jnp
from jax.experimental import pallas as pl
from jax.experimental.pallas import tpu as pltpu


def _conloss_kernel(pred_ref, tgt_ref, conf_ref, sum_ref, cnt_ref,
                    acc_sum, acc_cnt, *, hw, tiles_per_chunk):
    chunk = pl.program_id(1)
    i = pl.program_id(2)
    last = pl.num_programs(2) - 1

    # Reset the lane accumulators at the start of every (batch, chunk) segment.
    @pl.when(i == 0)
    def _():
        acc_sum[...] = jnp.zeros_like(acc_sum)
        acc_cnt[...] = jnp.zeros_like(acc_cnt)

    num_classes, tile_n = pred_ref.shape

    p = pred_ref[...].astype(jnp.float32)        # (C, TN) logits
    t = tgt_ref[...].astype(jnp.int32)           # (1, TN) labels (255 = ignore)
    c = conf_ref[...].astype(jnp.float32)        # (1, TN) confidence in [0, 100]

    # Logical pixel index inside this batch image: handles the ragged tail of
    # the last tile and any clamped duplicate tile of the last chunk.
    logical_blk = chunk * tiles_per_chunk + i
    lane = jax.lax.broadcasted_iota(jnp.int32, (1, tile_n), 1)
    gidx = logical_blk * tile_n + lane
    in_bounds = gidx < hw                        # (1, TN) bool

    # Zero out-of-bounds logits BEFORE exp so garbage boundary reads cannot
    # poison the softmax with inf/NaN.
    p = jnp.where(in_bounds, p, 0.0)

    # Channel softmax numerator only -- skip the full (C, TN) divide.
    m = jnp.max(p, axis=0, keepdims=True)        # (1, TN)
    e = jnp.exp(p - m)                           # (C, TN)
    sum_e = jnp.sum(e, axis=0, keepdims=True)    # (1, TN)

    # Select the numerator at the target class via a one-hot compare; labels
    # outside [0, C) (e.g. 255) select nothing, exactly like mask2onehot.
    cls = jax.lax.broadcasted_iota(jnp.int32, (num_classes, tile_n), 0)
    e_sel = jnp.sum(jnp.where(cls == t, e, 0.0), axis=0, keepdims=True)
    # One (1, TN) reciprocal instead of a (C, TN) divide.
    # TODO(synk): approx=True would push this to the EUP slot at ~1e-4 relative
    # error; kept exact so the result matches the reference to f32 precision.
    p_sel = e_sel * pl.reciprocal(sum_e, approx=False)

    has_class = jnp.logical_and(t >= 0, t < num_classes)
    valid_cls = jnp.logical_and(in_bounds, has_class)
    pre = c * (1.0 / 100.0)
    # sum_k |sm_k*oh_k - pre*oh_k| == [0 <= t < C] * |p_sel - pre|
    diff = jnp.where(valid_cls, jnp.abs(p_sel - pre), 0.0)   # (1, TN)

    # Lane-wise partial accumulation (pure VPU adds); scalar reduce deferred.
    acc_sum[...] += diff
    acc_cnt[...] += jnp.logical_and(in_bounds, t != 255).astype(jnp.float32)

    # Only on the last tile of this (batch, chunk): reduce to scalars and
    # broadcast into the (8, 128) output block (wrapper reads element [0, 0]).
    @pl.when(i == last)
    def _():
        sum_ref[...] = jnp.full(sum_ref.shape, jnp.sum(acc_sum[...]), jnp.float32)
        cnt_ref[...] = jnp.full(cnt_ref.shape, jnp.sum(acc_cnt[...]), jnp.float32)


def con_loss(predict, target, confidence_mask, *, tile_n=None, num_chunks=2):
    """ConLoss forward.

    predict: (B, C, H, W) logits (f32 or bf16); target: (B, H, W) int labels
    (255 = ignore); confidence_mask: (B, H, W) in [0, 100].
    """
    B, C, H, W = predict.shape
    HW = H * W

    # Free reshapes only: no transpose, no pad, no wrapper dtype cast.
    pred3 = predict.reshape(B, C, HW)
    tgt3 = target.reshape(B, 1, HW)
    conf3 = confidence_mask.reshape(B, 1, HW)

    # Pixel tile: last block dim must be a multiple of 128 or equal H*W.
    # Large tiles keep this HBM-bound kernel off the per-grid-step overhead.
    if tile_n is None:
        max_tile = 8192
        tile_n = HW if HW <= max_tile else max_tile
    assert tile_n == HW or tile_n % 128 == 0, \
        "tile_n must be a multiple of 128 or equal H*W"

    n_blk = pl.cdiv(HW, tile_n)
    n_chunks = max(1, min(num_chunks, n_blk))    # parallel pixel chunks (v7x 2nd TC)
    tiles_per_chunk = pl.cdiv(n_blk, n_chunks)
    need_clamp = n_chunks * tiles_per_chunk > n_blk

    def blk_idx(chunk, i):
        idx = chunk * tiles_per_chunk + i
        return jnp.minimum(idx, n_blk - 1) if need_clamp else idx

    in_idx = lambda b, chunk, i: (b, 0, blk_idx(chunk, i))
    out_idx = lambda b, chunk, i: (b, chunk, 0, 0)

    kernel = functools.partial(_conloss_kernel, hw=HW,
                               tiles_per_chunk=tiles_per_chunk)

    # Explicit VMEM budget: pipelined input blocks + lane accumulators plus
    # headroom, capped well below v7x's 64 MiB physical VMEM.
    blk_bytes = tile_n * (C * pred3.dtype.itemsize
                          + tgt3.dtype.itemsize + conf3.dtype.itemsize)
    scratch_bytes = 2 * 8 * tile_n * 4 + 2 * 2 * 8 * 128 * 4
    vmem_limit = int(min(48 << 20,
                         max(8 << 20, 3 * blk_bytes + scratch_bytes + (2 << 20))))

    sums, cnts = pl.pallas_call(
        kernel,
        out_shape=(jax.ShapeDtypeStruct((B, n_chunks, 8, 128), jnp.float32),
                   jax.ShapeDtypeStruct((B, n_chunks, 8, 128), jnp.float32)),
        grid_spec=pltpu.PrefetchScalarGridSpec(
            num_scalar_prefetch=0,
            grid=(B, n_chunks, tiles_per_chunk),
            in_specs=[
                pl.BlockSpec((None, C, tile_n), in_idx),
                pl.BlockSpec((None, 1, tile_n), in_idx),
                pl.BlockSpec((None, 1, tile_n), in_idx),
            ],
            out_specs=(
                pl.BlockSpec((None, None, 8, 128), out_idx),
                pl.BlockSpec((None, None, 8, 128), out_idx),
            ),
            scratch_shapes=[pltpu.VMEM((1, tile_n), jnp.float32),
                            pltpu.VMEM((1, tile_n), jnp.float32)],
        ),
        compiler_params=pltpu.CompilerParams(
            dimension_semantics=("parallel", "parallel", "arbitrary"),
            vmem_limit_bytes=vmem_limit,
        ),
    )(pred3, tgt3, conf3)

    return jnp.sum(sums[:, :, 0, 0]) / jnp.sum(cnts[:, :, 0, 0])


def con_loss_reference(predict, target, confidence_mask):
    """Pure-JAX reference matching the PyTorch ConLoss.forward semantics."""
    B, C, H, W = predict.shape
    val_num = jnp.sum(target != 255).astype(jnp.float32)
    onehot = (target[:, None, :, :] ==
              jnp.arange(C, dtype=target.dtype)[None, :, None, None]).astype(jnp.float32)
    sm = jax.nn.softmax(predict.astype(jnp.float32), axis=1)
    pre = (confidence_mask.astype(jnp.float32) / 100.0)[:, None, :, :] * onehot
    now = sm * onehot
    return jnp.sum(jnp.abs(now - pre)) / val_num


if __name__ == "__main__":
    key = jax.random.PRNGKey(0)
    k1, k2, k3, k4 = jax.random.split(key, 4)

    # Primary small example (num_classes = 4).
    B, C, H, W = 2, 4, 16, 16
    predict = jax.random.normal(k1, (B, C, H, W), dtype=jnp.float32)
    target = jax.random.randint(k2, (B, H, W), 0, C, dtype=jnp.int32)
    ignore = jax.random.bernoulli(k3, 0.1, (B, H, W))
    target = jnp.where(ignore, jnp.int32(255), target)
    confidence_mask = jax.random.uniform(k4, (B, H, W), dtype=jnp.float32) * 100.0

    loss = jax.block_until_ready(con_loss(predict, target, confidence_mask))
    ref = jax.block_until_ready(con_loss_reference(predict, target, confidence_mask))
    assert jnp.allclose(loss, ref, rtol=1e-5, atol=1e-6), (loss, ref)

    # Exercise the multi-tile / multi-chunk / ragged-tail path: H*W = 300 with
    # forced 128-wide tiles gives 3 tiles split over 2 parallel chunks (clamped
    # duplicate tile + masked tail).
    B2, C2, H2, W2 = 1, 4, 10, 30
    p2 = jax.random.normal(k1, (B2, C2, H2, W2), dtype=jnp.float32)
    t2 = jax.random.randint(k2, (B2, H2, W2), 0, C2, dtype=jnp.int32)
    t2 = jnp.where(jax.random.bernoulli(k3, 0.15, (B2, H2, W2)), jnp.int32(255), t2)
    c2 = jax.random.uniform(k4, (B2, H2, W2), dtype=jnp.float32) * 100.0
    loss2 = jax.block_until_ready(con_loss(p2, t2, c2, tile_n=128, num_chunks=2))
    ref2 = jax.block_until_ready(con_loss_reference(p2, t2, c2))
    assert jnp.allclose(loss2, ref2, rtol=1e-5, atol=1e-6), (loss2, ref2)

    print("KERNEL_OK")
</pallas_src>

<mosaic_0001>
module attributes {stable_mosaic.version = 11 : i64} {
  func.func @_conloss_kernel(%arg0: i32, %arg1: i32, %arg2: i32, %arg3: memref<1x4x256xf32, #tpu.memory_space<vmem>>, %arg4: memref<1x1x256xi32, #tpu.memory_space<vmem>>, %arg5: memref<1x1x256xf32, #tpu.memory_space<vmem>>, %arg6: memref<1x1x8x128xf32, #tpu.memory_space<vmem>>, %arg7: memref<1x1x8x128xf32, #tpu.memory_space<vmem>>, %arg8: memref<1x256xf32, #tpu.memory_space<vmem>>, %arg9: memref<1x256xf32, #tpu.memory_space<vmem>>) attributes {dimension_semantics = [#tpu.dimension_semantics<parallel>, #tpu.dimension_semantics<parallel>, #tpu.dimension_semantics<arbitrary>], iteration_bounds = array<i64: 2, 1, 1>, scalar_prefetch = 0 : i64, scratch_operands = 2 : i64, tpu.core_type = #tpu.core_type<tc>, window_params = [{transform_indices = @transform_0, window_bounds = array<i64: 1, 4, 256>}, {transform_indices = @transform_1, window_bounds = array<i64: 1, 1, 256>}, {transform_indices = @transform_2, window_bounds = array<i64: 1, 1, 256>}, {transform_indices = @transform_3, window_bounds = array<i64: 1, 1, 8, 128>}, {transform_indices = @transform_4, window_bounds = array<i64: 1, 1, 8, 128>}]} {
    %c0_i32 = arith.constant 0 : i32
    %0 = arith.cmpi eq, %arg2, %c0_i32 : i32
    %1 = arith.extui %0 : i1 to i32
    %c0_i32_0 = arith.constant 0 : i32
    %2 = arith.cmpi ne, %1, %c0_i32_0 : i32
    scf.if %2 {
      %cst_27 = arith.constant 0.000000e+00 : f32
      %63 = vector.broadcast %cst_27 : f32 to vector<1x256xf32>
      %c0_28 = arith.constant 0 : index
      %c0_29 = arith.constant 0 : index
      %64 = vector.load %arg8[%c0_28, %c0_29] : memref<1x256xf32, #tpu.memory_space<vmem>>, vector<1x256xf32>
      tpu.vector_store %arg8[%c0_28, %c0_29], %63 {strides = array<i32>} : memref<1x256xf32, #tpu.memory_space<vmem>>, vector<1x256xf32>,
      %cst_30 = arith.constant 0.000000e+00 : f32
      %65 = vector.broadcast %cst_30 : f32 to vector<1x256xf32>
      %c0_31 = arith.constant 0 : index
      %c0_32 = arith.constant 0 : index
      %66 = vector.load %arg9[%c0_31, %c0_32] : memref<1x256xf32, #tpu.memory_space<vmem>>, vector<1x256xf32>
      tpu.vector_store %arg9[%c0_31, %c0_32], %65 {strides = array<i32>} : memref<1x256xf32, #tpu.memory_space<vmem>>, vector<1x256xf32>,
    } else {
    }
    %c0 = arith.constant 0 : index
    %c0_1 = arith.constant 0 : index
    %c0_2 = arith.constant 0 : index
    %3 = vector.load %arg3[%c0, %c0_1, %c0_2] : memref<1x4x256xf32, #tpu.memory_space<vmem>>, vector<1x4x256xf32>
    %4 = vector.shape_cast %3 : vector<1x4x256xf32> to vector<4x256xf32>
    %c0_3 = arith.constant 0 : index
    %c0_4 = arith.constant 0 : index
    %c0_5 = arith.constant 0 : index
    %5 = vector.load %arg4[%c0_3, %c0_4, %c0_5] : memref<1x1x256xi32, #tpu.memory_space<vmem>>, vector<1x1x256xi32>
    %6 = vector.shape_cast %5 : vector<1x1x256xi32> to vector<1x256xi32>
    %c0_6 = arith.constant 0 : index
    %c0_7 = arith.constant 0 : index
    %c0_8 = arith.constant 0 : index
    %7 = vector.load %arg5[%c0_6, %c0_7, %c0_8] : memref<1x1x256xf32, #tpu.memory_space<vmem>>, vector<1x1x256xf32>
    %8 = vector.shape_cast %7 : vector<1x1x256xf32> to vector<1x256xf32>
    %c1_i32 = arith.constant 1 : i32
    %9 = arith.muli %arg1, %c1_i32 : i32
    %10 = arith.addi %9, %arg2 : i32
    %11 = tpu.iota {dimensions = array<i32: 1>} : vector<1x256xi32>
    %c256_i32 = arith.constant 256 : i32
    %12 = arith.muli %10, %c256_i32 : i32
    %13 = vector.broadcast %12 : i32 to vector<1x256xi32>
    %14 = arith.addi %13, %11 : vector<1x256xi32>
    %c256_i32_9 = arith.constant 256 : i32
    %15 = vector.broadcast %c256_i32_9 : i32 to vector<1x256xi32>
    %16 = arith.cmpi slt, %14, %15 : vector<1x256xi32>
    %cst = arith.constant 0.000000e+00 : f32
    %17 = vector.shape_cast %16 : vector<1x256xi1> to vector<1x256xi1>
    %18 = vector.broadcast %17 : vector<1x256xi1> to vector<4x256xi1>
    %19 = vector.broadcast %cst : f32 to vector<4x256xf32>
    %20 = arith.select %18, %4, %19 : vector<4x256xi1>, vector<4x256xf32>
    %cst_10 = arith.constant dense<0xFF800000> : vector<256xf32>
    %21 = vector.multi_reduction <maximumf>, %20, %cst_10 [0] : vector<4x256xf32> to vector<256xf32>
    %22 = vector.shape_cast %21 : vector<256xf32> to vector<1x256xf32>
    %23 = vector.broadcast %22 : vector<1x256xf32> to vector<4x256xf32>
    %24 = arith.subf %20, %23 : vector<4x256xf32>
    %25 = math.exp %24 : vector<4x256xf32>
    %cst_11 = arith.constant dense<0.000000e+00> : vector<256xf32>
    %26 = vector.multi_reduction <add>, %25, %cst_11 [0] : vector<4x256xf32> to vector<256xf32>
    %27 = vector.shape_cast %26 : vector<256xf32> to vector<1x256xf32>
    %28 = tpu.iota {dimensions = array<i32: 0>} : vector<4x256xi32>
    %29 = vector.broadcast %6 : vector<1x256xi32> to vector<4x256xi32>
    %30 = arith.cmpi eq, %28, %29 : vector<4x256xi32>
    %cst_12 = arith.constant 0.000000e+00 : f32
    %31 = vector.broadcast %cst_12 : f32 to vector<4x256xf32>
    %32 = arith.select %30, %25, %31 : vector<4x256xi1>, vector<4x256xf32>
    %cst_13 = arith.constant dense<0.000000e+00> : vector<256xf32>
    %33 = vector.multi_reduction <add>, %32, %cst_13 [0] : vector<4x256xf32> to vector<256xf32>
    %34 = vector.shape_cast %33 : vector<256xf32> to vector<1x256xf32>
    %35 = tpu.reciprocal %27 : vector<1x256xf32> -> vector<1x256xf32>
    %36 = arith.mulf %34, %35 : vector<1x256xf32>
    %c0_i32_14 = arith.constant 0 : i32
    %37 = vector.broadcast %c0_i32_14 : i32 to vector<1x256xi32>
    %38 = arith.cmpi sge, %6, %37 : vector<1x256xi32>
    %c4_i32 = arith.constant 4 : i32
    %39 = vector.broadcast %c4_i32 : i32 to vector<1x256xi32>
    %40 = arith.cmpi slt, %6, %39 : vector<1x256xi32>
    %41 = arith.andi %38, %40 : vector<1x256xi1>
    %42 = arith.andi %16, %41 : vector<1x256xi1>
    %cst_15 = arith.constant 0.00999999977 : f32
    %43 = vector.broadcast %cst_15 : f32 to vector<1x256xf32>
    %44 = arith.mulf %8, %43 : vector<1x256xf32>
    %45 = arith.subf %36, %44 : vector<1x256xf32>
    %46 = math.absf %45 : vector<1x256xf32>
    %cst_16 = arith.constant 0.000000e+00 : f32
    %47 = vector.broadcast %cst_16 : f32 to vector<1x256xf32>
    %48 = arith.select %42, %46, %47 : vector<1x256xi1>, vector<1x256xf32>
    %c0_17 = arith.constant 0 : index
    %c0_18 = arith.constant 0 : index
    %49 = vector.load %arg8[%c0_17, %c0_18] : memref<1x256xf32, #tpu.memory_space<vmem>>, vector<1x256xf32>
    %50 = arith.addf %49, %48 : vector<1x256xf32>
    %c0_19 = arith.constant 0 : index
    %c0_20 = arith.constant 0 : index
    %51 = vector.load %arg8[%c0_19, %c0_20] : memref<1x256xf32, #tpu.memory_space<vmem>>, vector<1x256xf32>
    tpu.vector_store %arg8[%c0_19, %c0_20], %50 {strides = array<i32>} : memref<1x256xf32, #tpu.memory_space<vmem>>, vector<1x256xf32>,
    %c0_21 = arith.constant 0 : index
    %c0_22 = arith.constant 0 : index
    %52 = vector.load %arg9[%c0_21, %c0_22] : memref<1x256xf32, #tpu.memory_space<vmem>>, vector<1x256xf32>
    %c255_i32 = arith.constant 255 : i32
    %53 = vector.broadcast %c255_i32 : i32 to vector<1x256xi32>
    %54 = arith.cmpi ne, %6, %53 : vector<1x256xi32>
    %55 = arith.andi %16, %54 : vector<1x256xi1>
    %56 = arith.extui %55 : vector<1x256xi1> to vector<1x256xi32>
    %57 = arith.sitofp %56 : vector<1x256xi32> to vector<1x256xf32>
    %58 = arith.addf %52, %57 : vector<1x256xf32>
    %c0_23 = arith.constant 0 : index
    %c0_24 = arith.constant 0 : index
    %59 = vector.load %arg9[%c0_23, %c0_24] : memref<1x256xf32, #tpu.memory_space<vmem>>, vector<1x256xf32>
    tpu.vector_store %arg9[%c0_23, %c0_24], %58 {strides = array<i32>} : memref<1x256xf32, #tpu.memory_space<vmem>>, vector<1x256xf32>,
    %c0_i32_25 = arith.constant 0 : i32
    %60 = arith.cmpi eq, %arg2, %c0_i32_25 : i32
    %61 = arith.extui %60 : i1 to i32
    %c0_i32_26 = arith.constant 0 : i32
    %62 = arith.cmpi ne, %61, %c0_i32_26 : i32
    scf.if %62 {
      %c0_27 = arith.constant 0 : index
      %c0_28 = arith.constant 0 : index
      %63 = vector.load %arg8[%c0_27, %c0_28] : memref<1x256xf32, #tpu.memory_space<vmem>>, vector<1x256xf32>
      %64 = vector.shape_cast %63 : vector<1x256xf32> to vector<1x1x256xf32>
      %cst_29 = arith.constant dense<0.000000e+00> : vector<1xf32>
      %65 = vector.multi_reduction <add>, %64, %cst_29 [1, 2] : vector<1x1x256xf32> to vector<1xf32>
      %66 = vector.shape_cast %65 : vector<1xf32> to vector<1x1x1xf32>
      %67 = vector.extract %66[0, 0, 0] : f32 from vector<1x1x1xf32>
      %68 = vector.broadcast %67 : f32 to vector<8x128xf32>
      %c0_30 = arith.constant 0 : index
      %c0_31 = arith.constant 0 : index
      %c0_32 = arith.constant 0 : index
      %c0_33 = arith.constant 0 : index
      %69 = vector.load %arg6[%c0_30, %c0_31, %c0_32, %c0_33] : memref<1x1x8x128xf32, #tpu.memory_space<vmem>>, vector<1x1x8x128xf32>
      %70 = vector.shape_cast %69 : vector<1x1x8x128xf32> to vector<8x128xf32>
      %71 = vector.shape_cast %68 : vector<8x128xf32> to vector<1x1x8x128xf32>
      tpu.vector_store %arg6[%c0_30, %c0_31, %c0_32, %c0_33], %71 {strides = array<i32>} : memref<1x1x8x128xf32, #tpu.memory_space<vmem>>, vector<1x1x8x128xf32>,
      %c0_34 = arith.constant 0 : index
      %c0_35 = arith.constant 0 : index
      %72 = vector.load %arg9[%c0_34, %c0_35] : memref<1x256xf32, #tpu.memory_space<vmem>>, vector<1x256xf32>
      %73 = vector.shape_cast %72 : vector<1x256xf32> to vector<1x1x256xf32>
      %cst_36 = arith.constant dense<0.000000e+00> : vector<1xf32>
      %74 = vector.multi_reduction <add>, %73, %cst_36 [1, 2] : vector<1x1x256xf32> to vector<1xf32>
      %75 = vector.shape_cast %74 : vector<1xf32> to vector<1x1x1xf32>
      %76 = vector.extract %75[0, 0, 0] : f32 from vector<1x1x1xf32>
      %77 = vector.broadcast %76 : f32 to vector<8x128xf32>
      %c0_37 = arith.constant 0 : index
      %c0_38 = arith.constant 0 : index
      %c0_39 = arith.constant 0 : index
      %c0_40 = arith.constant 0 : index
      %78 = vector.load %arg7[%c0_37, %c0_38, %c0_39, %c0_40] : memref<1x1x8x128xf32, #tpu.memory_space<vmem>>, vector<1x1x8x128xf32>
      %79 = vector.shape_cast %78 : vector<1x1x8x128xf32> to vector<8x128xf32>
      %80 = vector.shape_cast %77 : vector<8x128xf32> to vector<1x1x8x128xf32>
      tpu.vector_store %arg7[%c0_37, %c0_38, %c0_39, %c0_40], %80 {strides = array<i32>} : memref<1x1x8x128xf32, #tpu.memory_space<vmem>>, vector<1x1x8x128xf32>,
    } else {
    }
    return
  }
  func.func @transform_0(%arg0: i32, %arg1: i32, %arg2: i32) -> (i32, i32, i32) {
    %c1_i32 = arith.constant 1 : i32
    %0 = arith.muli %arg1, %c1_i32 : i32
    %1 = arith.addi %0, %arg2 : i32
    %c0_i32 = arith.constant 0 : i32
    %c0_i32_0 = arith.constant 0 : i32
    return %arg0, %c0_i32, %1 : i32, i32, i32
  }
  func.func @transform_1(%arg0: i32, %arg1: i32, %arg2: i32) -> (i32, i32, i32) {
    %c1_i32 = arith.constant 1 : i32
    %0 = arith.muli %arg1, %c1_i32 : i32
    %1 = arith.addi %0, %arg2 : i32
    %c0_i32 = arith.constant 0 : i32
    %c0_i32_0 = arith.constant 0 : i32
    return %arg0, %c0_i32, %1 : i32, i32, i32
  }
  func.func @transform_2(%arg0: i32, %arg1: i32, %arg2: i32) -> (i32, i32, i32) {
    %c1_i32 = arith.constant 1 : i32
    %0 = arith.muli %arg1, %c1_i32 : i32
    %1 = arith.addi %0, %arg2 : i32
    %c0_i32 = arith.constant 0 : i32
    %c0_i32_0 = arith.constant 0 : i32
    return %arg0, %c0_i32, %1 : i32, i32, i32
  }
  func.func @transform_3(%arg0: i32, %arg1: i32, %arg2: i32) -> (i32, i32, i32, i32) {
    %c0_i32 = arith.constant 0 : i32
    %c0_i32_0 = arith.constant 0 : i32
    %c0_i32_1 = arith.constant 0 : i32
    return %arg0, %arg1, %c0_i32, %c0_i32_0 : i32, i32, i32, i32
  }
  func.func @transform_4(%arg0: i32, %arg1: i32, %arg2: i32) -> (i32, i32, i32, i32) {
    %c0_i32 = arith.constant 0 : i32
    %c0_i32_0 = arith.constant 0 : i32
    %c0_i32_1 = arith.constant 0 : i32
    return %arg0, %arg1, %c0_i32, %c0_i32_0 : i32, i32, i32, i32
  }
}

</mosaic_0001>

<llo_original>
// kernel: tpu_custom_call.1
$region0: #{tpu_custom_call.1}
  #allocation0 [shape = 'u32[]', space=smem, size = 0x4, offset = 0x4, fixed_abs, tag = 'smem constant byte address 0x4 - core index']
  #allocation1 [shape = 'u32[144,128]{1,0:T(1,128)}', space=vmem, size = 0x12000, scoped, tag = 'internal scratch']
  #allocation2 [shape = 'f32[1,256]{1,0:T(1,128)}', space=vmem, size = 0x400, scoped, tag = 'scratch operand']
  #allocation3 [shape = 'f32[1,256]{1,0:T(1,128)}', space=vmem, size = 0x400, scoped, tag = 'scratch operand']
  %s0 = inlined_call_operand.hbm [shape: f32[2,4,256], index: 0, kind: input, shape index: {}]
  %s1 = inlined_call_operand.hbm [shape: s32[2,1,256], index: 1, kind: input, shape index: {}]
  %s2 = inlined_call_operand.vmem [shape: f32[2,1,256], index: 2, kind: input, shape index: {}]
  %s3 = inlined_call_operand.hbm [shape: f32[2,1,8,128], index: 3, kind: output, shape index: {0}]
  %s4 = inlined_call_operand.hbm [shape: f32[2,1,8,128], index: 4, kind: output, shape index: {1}]
  %5 = xla_tuple %s3, %s4
  %s6 = sld [smem:[#allocation0]]
  $region69: #{tpu_custom_call.1} parent=0
    _
  %s8 = ssub.s32 1, %s6
  %s9 = scalar_select 0, %s8, %s6
  $region1: #{tpu_custom_call.1} parent=0
    #allocation4 [shape = 'u8[8192]{0}', space=vmem, size = 0x2000, scoped, tag = 'input window, operand 0']
    #allocation5 [shape = 's32[2]{0}', space=sflag, size = 0x8, scoped, tag = 'scoped memory for tpu_custom_call.1']
    #allocation6 [shape = 's32[2]{0}', space=sflag, size = 0x8, scoped, tag = 'scoped memory for tpu_custom_call.1']
    #allocation7 [shape = 'u8[2048]{0}', space=vmem, size = 0x800, scoped, tag = 'input window, operand 1']
    #allocation8 [shape = 's32[2]{0}', space=sflag, size = 0x8, scoped, tag = 'scoped memory for tpu_custom_call.1']
    #allocation9 [shape = 'u8[8192]{0}', space=vmem, size = 0x2000, scoped, tag = 'output window, operand 0']
    #allocation10 [shape = 'u8[8192]{0}', space=vmem, size = 0x2000, scoped, tag = 'output window, operand 1']
    #allocation11 [shape = 's32[2]{0}', space=sflag, size = 0x8, scoped, tag = 'scoped memory for tpu_custom_call.1']
    %10 = vsyncpa [#allocation5], 0
    %s11 = scalar_lea.sflag [#allocation5], 1
    %12 = vsyncpa %s11, 0
    %13 = vsyncpa [#allocation8], 0
    %s14 = scalar_lea.sflag [#allocation8], 1
    %15 = vsyncpa %s14, 0
    %16 = vsyncpa [#allocation6], 0
    %s17 = scalar_lea.sflag [#allocation6], 1
    %18 = vsyncpa %s17, 0
    %19 = vsyncpa [#allocation11], 0
    %s20 = scalar_lea.sflag [#allocation11], 1
    %21 = vsyncpa %s20, 0
    loop: start=0, step=1, limit=4
    $region2: #{tpu_custom_call.1} parent=1 // loop_pre_header
      _
    $region3: #{tpu_custom_call.1} parent=1 // loop_header
      %s23 = sphi 0, %s27
      %p24 = scmp.ge.s32.totalorder %s23, 4
      %s30 = sphi 0, %s49
      %s31 = sphi 0, %s45
      %s32 = sphi 0, %s41
      %s33 = sphi 0, %s30
      %s34 = sphi 0, %s31
      %s35 = sphi 0, %s32
      %s36 = sphi 0, %s33
      %s37 = sphi 0, %s34
      %s38 = sphi 0, %s35
      %s56 = sphi 0, %s58
      %s59 = sphi 0, %s56
      %s60 = sphi 0, %s59
      %s76 = sphi 0, %s60
      %s86 = sphi 0, %s88
      %s89 = sphi 0, %s86
      %s90 = sphi 0, %s89
      %s106 = sphi 0, %s90
      %s116 = sphi 0, %s118
      %s119 = sphi 0, %s116
      %s120 = sphi 0, %s119
      %s136 = sphi 0, %s120
      %s144 = sphi 0, %s146
      %s147 = sphi 0, %s144
      %s148 = sphi 0, %s147
      %s164 = sphi 0, %s148
      %s172 = sphi 0, %s174
      %s175 = sphi 0, %s172
      %s176 = sphi 0, %s175
      %s192 = sphi 0, %s176
    $region4: #{tpu_custom_call.1} parent=1 // loop_header_branch
      %26 = sbr.rel (%p24) target = $region8
    $region5: #{tpu_custom_call.1} parent=1 // loop_body
      %s28 = ssub.s32 %s23, 1
      %s29 = ssub.s32 %s23, 2
      %s39 = sadd.s32 1, %s32
      %p40 = scmp.ge.s32.totalorder %s39, 1
      %s41 = scalar_select %p40, 0, %s39
      %s42 = sadd.s32 1, %s31
      %s43 = scalar_select %p40, %s42, %s31
      %p44 = scmp.ge.s32.totalorder %s43, 1
      %s45 = scalar_select %p44, 0, %s43
      %s46 = sadd.s32 1, %s30
      %s47 = scalar_select %p44, %s46, %s30
      %p48 = scmp.ge.s32.totalorder %s47, 2
      %s49 = scalar_select %p48, 0, %s47
      %s50 = sadd.s32 %s31, %s32
      %s51 = sadd.s32 %s45, %s41
      %s52 = ssub.s32 %s30, %s49
      %s53 = ssub.s32 %s50, %s51
      %s54 = sor.u32 %s52, %s53
      %p55 = scmp.eq.s32.totalorder %s54, 0
      %s57 = sadd.s32 %s56, 1
      %s58 = scalar_select %p55, %s56, %s57
      %p61 = pneg %p55
      %p62 = scmp.eq.s32.totalorder %s23, 1
      %p63 = por %p61, %p62
      %p64 = scmp.ne.s32.totalorder %s56, %s59
      %p65 = scmp.eq.s32.totalorder %s23, 0
      %p66 = por %p64, %p65
      %p67 = scmp.ne.s32.totalorder %s56, %s59
      %p68 = scmp.eq.s32.totalorder %s28, 1
      %p69 = por %p67, %p68
      %p70 = scmp.ne.s32.totalorder %s59, %s60
      %p71 = scmp.eq.s32.totalorder %s28, 0
      %p72 = por %p70, %p71
      %p73 = scmp.ne.s32.totalorder %s59, %s60
      %p74 = scmp.eq.s32.totalorder %s29, 1
      %p75 = por %p73, %p74
      %p77 = scmp.ne.s32.totalorder %s60, %s76
      %p78 = scmp.eq.s32.totalorder %s29, 0
      %p79 = por %p77, %p78
      %s80 = sadd.s32 %s31, %s32
      %s81 = sadd.s32 %s45, %s41
      %s82 = ssub.s32 %s30, %s49
      %s83 = ssub.s32 %s80, %s81
      %s84 = sor.u32 %s82, %s83
      %p85 = scmp.eq.s32.totalorder %s84, 0
      %s87 = sadd.s32 %s86, 1
      %s88 = scalar_select %p85, %s86, %s87
      %p91 = pneg %p85
      %p92 = scmp.eq.s32.totalorder %s23, 1
      %p93 = por %p91, %p92
      %p94 = scmp.ne.s32.totalorder %s86, %s89
      %p95 = scmp.eq.s32.totalorder %s23, 0
      %p96 = por %p94, %p95
      %p97 = scmp.ne.s32.totalorder %s86, %s89
      %p98 = scmp.eq.s32.totalorder %s28, 1
      %p99 = por %p97, %p98
      %p100 = scmp.ne.s32.totalorder %s89, %s90
      %p101 = scmp.eq.s32.totalorder %s28, 0
      %p102 = por %p100, %p101
      %p103 = scmp.ne.s32.totalorder %s89, %s90
      %p104 = scmp.eq.s32.totalorder %s29, 1
      %p105 = por %p103, %p104
      %p107 = scmp.ne.s32.totalorder %s90, %s106
      %p108 = scmp.eq.s32.totalorder %s29, 0
      %p109 = por %p107, %p108
      %s110 = sadd.s32 %s31, %s32
      %s111 = sadd.s32 %s45, %s41
      %s112 = ssub.s32 %s30, %s49
      %s113 = ssub.s32 %s110, %s111
      %s114 = sor.u32 %s112, %s113
      %p115 = scmp.eq.s32.totalorder %s114, 0
      %s117 = sadd.s32 %s116, 1
      %s118 = scalar_select %p115, %s116, %s117
      %p121 = pneg %p115
      %p122 = scmp.eq.s32.totalorder %s23, 1
      %p123 = por %p121, %p122
      %p124 = scmp.ne.s32.totalorder %s116, %s119
      %p125 = scmp.eq.s32.totalorder %s23, 0
      %p126 = por %p124, %p125
      %p127 = scmp.ne.s32.totalorder %s116, %s119
      %p128 = scmp.eq.s32.totalorder %s28, 1
      %p129 = por %p127, %p128
      %p130 = scmp.ne.s32.totalorder %s119, %s120
      %p131 = scmp.eq.s32.totalorder %s28, 0
      %p132 = por %p130, %p131
      %p133 = scmp.ne.s32.totalorder %s119, %s120
      %p134 = scmp.eq.s32.totalorder %s29, 1
      %p135 = por %p133, %p134
      %p137 = scmp.ne.s32.totalorder %s120, %s136
      %p138 = scmp.eq.s32.totalorder %s29, 0
      %p139 = por %p137, %p138
      %s140 = ssub.s32 %s30, %s49
      %s141 = ssub.s32 %s31, %s45
      %s142 = sor.u32 %s140, %s141
      %p143 = scmp.eq.s32.totalorder %s142, 0
      %s145 = sadd.s32 %s144, 1
      %s146 = scalar_select %p143, %s144, %s145
      %p149 = pneg %p143
      %p150 = scmp.eq.s32.totalorder %s23, 1
      %p151 = por %p149, %p150
      %p152 = scmp.ne.s32.totalorder %s144, %s147
      %p153 = scmp.eq.s32.totalorder %s23, 0
      %p154 = por %p152, %p153
      %p155 = scmp.ne.s32.totalorder %s144, %s147
      %p156 = scmp.eq.s32.totalorder %s28, 1
      %p157 = por %p155, %p156
      %p158 = scmp.ne.s32.totalorder %s147, %s148
      %p159 = scmp.eq.s32.totalorder %s28, 0
      %p160 = por %p158, %p159
      %p161 = scmp.ne.s32.totalorder %s147, %s148
      %p162 = scmp.eq.s32.totalorder %s29, 1
      %p163 = por %p161, %p162
      %p165 = scmp.ne.s32.totalorder %s148, %s164
      %p166 = scmp.eq.s32.totalorder %s29, 0
      %p167 = por %p165, %p166
      %s168 = ssub.s32 %s30, %s49
      %s169 = ssub.s32 %s31, %s45
      %s170 = sor.u32 %s168, %s169
      %p171 = scmp.eq.s32.totalorder %s170, 0
      %s173 = sadd.s32 %s172, 1
      %s174 = scalar_select %p171, %s172, %s173
      %p177 = pneg %p171
      %p178 = scmp.eq.s32.totalorder %s23, 1
      %p179 = por %p177, %p178
      %p180 = scmp.ne.s32.totalorder %s172, %s175
      %p181 = scmp.eq.s32.totalorder %s23, 0
      %p182 = por %p180, %p181
      %p183 = scmp.ne.s32.totalorder %s172, %s175
      %p184 = scmp.eq.s32.totalorder %s28, 1
      %p185 = por %p183, %p184
      %p186 = scmp.ne.s32.totalorder %s175, %s176
      %p187 = scmp.eq.s32.totalorder %s28, 0
      %p188 = por %p186, %p187
      %p189 = scmp.ne.s32.totalorder %s175, %s176
      %p190 = scmp.eq.s32.totalorder %s29, 1
      %p191 = por %p189, %p190
      %p193 = scmp.ne.s32.totalorder %s176, %s192
      %p194 = scmp.eq.s32.totalorder %s29, 0
      %p195 = por %p193, %p194
      %p196 = scmp.le.s32.totalorder 1, %s23
      %p197 = scmp.lt.s32.totalorder %s23, 3
      %p198 = pnand %p196, %p197
      %p199 = pneg %p198
      // Predicated region
      $region9: #{tpu_custom_call.1} parent=5 // pred_check
        _
      $region10: #{tpu_custom_call.1} parent=5 // pred_check_branch
        %201 = sbr.rel (%p198) target = $region12
      $region11: #{tpu_custom_call.1} parent=5 // pred_region
        %s202 = ssub.s32 %s23, 1
      $region12: #{tpu_custom_call.1} parent=5 // pred_fallthru
        _
      %p203 = scmp.lt.s32.totalorder %s23, 2
      // Predicated region
      $region13: #{tpu_custom_call.1} parent=5 // pred_check
        %p204 = pneg %p203
      $region14: #{tpu_custom_call.1} parent=5 // pred_check_branch
        %206 = sbr.rel (%p204) target = $region16
      $region15: #{tpu_custom_call.1} parent=5 // pred_region
        // Predicated region
        $region17: #{tpu_custom_call.1} parent=15 // pred_check
          %p207 = pneg %p66
        $region18: #{tpu_custom_call.1} parent=15 // pred_check_branch
          %209 = sbr.rel (%p207) target = $region20
        $region19: #{tpu_custom_call.1} parent=15 // pred_region
          %s210 = sand.u32 %s56, 1
          %s211 = scalar_lea.sflag [#allocation5], %s210
          %s212 = sand.u32 %s56, 1
          %s213 = smul.addr %s212, 8
          %s214 = scalar_lea.vmem [#allocation4], %s213
          %s215 = sadd.s32 %s31, %s32
          %s216 = smul.u32 2, %s215
          %s218 = ssub.s32 128, 128
          %219 = vsyncadd %s211, %s218
          %s220 = smul.addr %s30, 2
          %s221 = sadd.s32 %s216, %s220
          %s222 = smul.addr %s221, 64
          %s223 = scalar_lea.hbm %s0, %s222
          %s225 = sshll.u32 %s214, 4
          %s226 = int_to_ptr.vmem [resolvable:$true] %s225
          %228 = dma.hbm_to_vmem [thread:$0]  %s223, 128, %s226, %s211
        $region20: #{tpu_custom_call.1} parent=15 // pred_fallthru
          _
        // Predicated region
        $region21: #{tpu_custom_call.1} parent=15 // pred_check
          %p229 = pneg %p96
        $region22: #{tpu_custom_call.1} parent=15 // pred_check_branch
          %231 = sbr.rel (%p229) target = $region24
        $region23: #{tpu_custom_call.1} parent=15 // pred_region
          %s232 = sand.u32 %s86, 1
          %s233 = scalar_lea.sflag [#allocation8], %s232
          %s234 = sand.u32 %s86, 1
          %s235 = smul.addr %s234, 2
          %s236 = scalar_lea.vmem [#allocation7], %s235
          %s237 = sadd.s32 %s31, %s32
          %s238 = smul.u32 2, %s237
          %s240 = ssub.s32 32, 32
          %241 = vsyncadd %s233, %s240
          %s242 = smul.addr %s30, 2
          %s243 = sadd.s32 %s238, %s242
          %s244 = smul.addr %s243, 16
          %s245 = scalar_lea.hbm %s1, %s244
          %s247 = sshll.u32 %s236, 4
          %s248 = int_to_ptr.vmem [resolvable:$true] %s247
          %250 = dma.hbm_to_vmem [thread:$0]  %s245, 32, %s248, %s233
        $region24: #{tpu_custom_call.1} parent=15 // pred_fallthru
          _
        // Predicated region
        $region25: #{tpu_custom_call.1} parent=15 // pred_check
          %p251 = pneg %p126
        $region26: #{tpu_custom_call.1} parent=15 // pred_check_branch
          %253 = sbr.rel (%p251) target = $region28
        $region27: #{tpu_custom_call.1} parent=15 // pred_region
          %s254 = sadd.s32 %s31, %s32
          %s255 = smul.u32 2, %s254
          %p256 = scmp.lt.s32.totalorder %s30, 1
          %s257 = scalar_select %p256, %s30, 1
          %p258 = scmp.lt.s32.totalorder %s255, 1
          %s259 = scalar_select %p258, %s255, 1
          %s260 = smul.addr %s257, 2
          %s261 = sadd.s32 %s259, %s260
          %s262 = scalar_lea.vmem %s2, %s261
          %s263 = sadd.s32 %s31, %s32
          %s264 = smul.u32 2, %s263
        $region28: #{tpu_custom_call.1} parent=15 // pred_fallthru
          _
      $region16: #{tpu_custom_call.1} parent=5 // pred_fallthru
        _
      %p265 = scmp.le.s32.totalorder 1, %s23
      %p266 = scmp.lt.s32.totalorder %s23, 3
      %p267 = pnand %p265, %p266
      %p268 = pneg %p267
      // Predicated region
      $region29: #{tpu_custom_call.1} parent=5 // pred_check
        _
      $region30: #{tpu_custom_call.1} parent=5 // pred_check_branch
        %270 = sbr.rel (%p267) target = $region32
      $region31: #{tpu_custom_call.1} parent=5 // pred_region
        %s271 = ssub.s32 %s23, 1
        %s272 = sand.u32 %s59, 1
        %s273 = scalar_lea.sflag [#allocation5], %s272
        %s274 = sand.u32 %s59, 1
        %s275 = smul.addr %s274, 8
        %s276 = scalar_lea.vmem [#allocation4], %s275
        // Predicated region
        $region33: #{tpu_custom_call.1} parent=31 // pred_check
          %p277 = pneg %p72
        $region34: #{tpu_custom_call.1} parent=31 // pred_check_branch
          %279 = sbr.rel (%p277) target = $region36
        $region35: #{tpu_custom_call.1} parent=31 // pred_region
          %280 = dma.done %s273, 128
        $region36: #{tpu_custom_call.1} parent=31 // pred_fallthru
          _
        %s281 = sand.u32 %s89, 1
        %s282 = scalar_lea.sflag [#allocation8], %s281
        %s283 = sand.u32 %s89, 1
        %s284 = smul.addr %s283, 2
        %s285 = scalar_lea.vmem [#allocation7], %s284
        // Predicated region
        $region37: #{tpu_custom_call.1} parent=31 // pred_check
          %p286 = pneg %p102
        $region38: #{tpu_custom_call.1} parent=31 // pred_check_branch
          %288 = sbr.rel (%p286) target = $region40
        $region39: #{tpu_custom_call.1} parent=31 // pred_region
          %289 = dma.done %s282, 32
        $region40: #{tpu_custom_call.1} parent=31 // pred_fallthru
          _
        %s290 = sand.u32 %s59, 1
        %s291 = scalar_lea.sflag [#allocation5], %s290
        %s292 = sand.u32 %s59, 1
        %s293 = smul.addr %s292, 8
        %s294 = scalar_lea.vmem [#allocation4], %s293
        %p295 = pneg %p72
        %p296 = pneg %p69
        %s297 = sand.u32 %s89, 1
        %s298 = scalar_lea.sflag [#allocation8], %s297
        %s299 = sand.u32 %s89, 1
        %s300 = smul.addr %s299, 2
        %s301 = scalar_lea.vmem [#allocation7], %s300
        %p302 = pneg %p102
        %p303 = pneg %p99
        %s304 = sadd.s32 %s34, %s35
        %s305 = smul.u32 2, %s304
        %p306 = scmp.lt.s32.totalorder %s33, 1
        %s307 = scalar_select %p306, %s33, 1
        %p308 = scmp.lt.s32.totalorder %s305, 1
        %s309 = scalar_select %p308, %s305, 1
        %s310 = smul.addr %s307, 2
        %s311 = sadd.s32 %s309, %s310
        %s312 = scalar_lea.vmem %s2, %s311
        %p313 = pneg %p132
        %p314 = pneg %p129
        %p315 = pneg %p160
        %p316 = pneg %p157
        %s317 = sand.u32 %s147, 1
        %s318 = scalar_lea.sflag [#allocation6], %s317
        %s319 = sand.u32 %s147, 1
        %s320 = smul.addr %s319, 8
        %s321 = scalar_lea.vmem [#allocation9], %s320
        %p322 = pneg %p188
        %p323 = pneg %p185
        %s324 = sand.u32 %s175, 1
        %s325 = scalar_lea.sflag [#allocation11], %s324
        %s326 = sand.u32 %s175, 1
        %s327 = smul.addr %s326, 8
        %s328 = scalar_lea.vmem [#allocation10], %s327
        %s329 = sadd.s32 %s34, %s35
        %s330 = smul.u32 2, %s329
        %s331 = sadd.s32 %s34, %s35
        %s332 = smul.u32 2, %s331
        %s333 = sadd.s32 %s34, %s35
        %s334 = smul.u32 2, %s333
        %p335 = scmp.lt.s32.totalorder %s33, 1
        %s336 = scalar_select %p335, %s33, 1
        %p337 = scmp.lt.s32.totalorder %s334, 1
        %s338 = scalar_select %p337, %s334, 1
        %s339 = smul.addr %s336, 2
        %s340 = sadd.s32 %s338, %s339
        %s341 = scalar_lea.vmem %s2, %s340
        %s342 = sadd.s32 %s34, %s35
        %s343 = smul.u32 2, %s342
        %p344 = scmp.eq.s32.totalorder %s35, 0
        // Predicated region
        $region41: #{tpu_custom_call.1} parent=31 // pred_check
          %p345 = pneg %p344
        $region42: #{tpu_custom_call.1} parent=31 // pred_check_branch
          %347 = sbr.rel (%p345) target = $region44
        $region43: #{tpu_custom_call.1} parent=31 // pred_region
          %v348 = vlaneseq
          %vm349 = vcmp.ge.s32.totalorder %v348, 0
          %vm350 = vcmp.lt.s32.totalorder %v348, 256
          %vm351 = vmand %vm349, %vm350
          %352 = vst.msk [vmem:[#allocation2] sm:$0x3] %vm351, 0.0
          %353 = vst.msk [vmem:[#allocation3] sm:$0x3] %vm351, 0.0
        $region44: #{tpu_custom_call.1} parent=31 // pred_fallthru
          _
        %v354 = vld [vmem:[%s276] sm:$0xff]
        %v355 = vld [vmem:[%s285] sm:$0x3]
        %v356 = vld [vmem:[%s341] sm:$0x3]
        %s357 = sadd.s32 %s34, %s35
        %v358 = vlaneseq
        %v359 = vand.u32 %v358, 127
        %v360 = vadd.s32 %v359, 128
        %s361 = smul.u32 %s357, 256
        %v362 = vstv %s361
        %v363 = vadd.s32 %v362, %v359
        %v364 = vadd.s32 %v362, %v360
        %vm365 = vcmp.lt.s32.totalorder %v363, 256
        %vm366 = vcmp.lt.s32.totalorder %v364, 256
        %v367 = vsel %vm365, 1, 0
        %v368 = vsel %vm366, 1, 0
        %vm369 = vcmp.eq.s32.totalorder %v367, 1
        %vm370 = vcmp.eq.s32.totalorder %v368, 1
        %v372 = vcombine.high %v354, %v354
        %v374 = vsel %vm369, %v354, 0.0
        %v375 = vsel %vm370, %v372, 0.0
        %vm376 = vcmask 1043456
        %v377 = vsel %vm376, %v374, -inf
        %v378 = vrot.slane %v377, 4
        %v379 = vmax.f32 %v377, %v378
        %v380 = vrot.slane %v379, 2
        %v381 = vmax.f32 %v379, %v380
        %v382 = vrot.slane %v381, 1
        %v383 = vmax.f32 %v381, %v382
        %v384 = vsel %vm376, %v375, -inf
        %v385 = vrot.slane %v384, 4
        %v386 = vmax.f32 %v384, %v385
        %v387 = vrot.slane %v386, 2
        %v388 = vmax.f32 %v386, %v387
        %v389 = vrot.slane %v388, 1
        %v390 = vmax.f32 %v388, %v389
        %v391 = vsub.f32 %v374, %v383
        %v392 = vsub.f32 %v375, %v390
        %v393 = vmul.f32 %v391, 1.442695
        %v394 = vpow.pop %v393
        %v395 = vmul.f32 %v392, 1.442695
        %v396 = vpow.pop %v395
        %v397 = vsel %vm376, %v394, 0.0
        %v398 = vrot.slane %v397, 4
        %v399 = vadd.f32 %v397, %v398
        %v400 = vrot.slane %v399, 2
        %v401 = vadd.f32 %v399, %v400
        %v402 = vrot.slane %v401, 1
        %v403 = vadd.f32 %v401, %v402
        %v404 = vsel %vm376, %v396, 0.0
        %v405 = vrot.slane %v404, 4
        %v406 = vadd.f32 %v404, %v405
        %v407 = vrot.slane %v406, 2
        %v408 = vadd.f32 %v406, %v407
        %v409 = vrot.slane %v408, 1
        %v410 = vadd.f32 %v408, %v409
        %v411 = vlaneseq
        %v412 = vshrl.u32 %v411, 7
        %v413 = vlaneseq
        %v414 = vshrl.u32 %v413, 7
        %v415 = vsub.s32 0, %v414
        %v416 = vrot.slane %v355, %v415
        %v417 = vlaneseq
        %v418 = vshrl.u32 %v417, 7
        %v419 = vsub.s32 1, %v418
        %v420 = vrot.slane %v355, %v419
        %vm421 = vcmp.eq.s32.totalorder %v412, %v416
        %vm422 = vcmp.eq.s32.totalorder %v412, %v420
        %v423 = vsel %vm421, %v394, 0.0
        %v424 = vsel %vm422, %v396, 0.0
        %v425 = vsel %vm376, %v423, 0.0
        %v426 = vrot.slane %v425, 4
        %v427 = vadd.f32 %v425, %v426
        %v428 = vrot.slane %v427, 2
        %v429 = vadd.f32 %v427, %v428
        %v430 = vrot.slane %v429, 1
        %v431 = vadd.f32 %v429, %v430
        %v432 = vsel %vm376, %v424, 0.0
        %v433 = vrot.slane %v432, 4
        %v434 = vadd.f32 %v432, %v433
        %v435 = vrot.slane %v434, 2
        %v436 = vadd.f32 %v434, %v435
        %v437 = vrot.slane %v436, 1
        %v438 = vadd.f32 %v436, %v437
        %v439 = vrcp.pop %v403
        %v440 = vrcp.pop %v410
        %v441 = vmul.f32 %v431, %v439
        %v442 = vmul.f32 %v438, %v440
        %vm443 = vcmp.ge.s32.totalorder %v355, 0
        %vm444 = vcmp.lt.s32.totalorder %v355, 4
        %vm445 = vmand %vm443, %vm444
        %v446 = vsel %vm445, 1, 0
        %v447 = vlaneseq
        %v448 = vshrl.u32 %v447, 7
        %v449 = vsub.s32 0, %v448
        %v450 = vrot.slane %v446, %v449
        %v451 = vlaneseq
        %v452 = vshrl.u32 %v451, 7
        %v453 = vsub.s32 1, %v452
        %v454 = vrot.slane %v446, %v453
        %vm455 = vcmp.ne.s32.totalorder %v450, 0
        %vm456 = vcmp.ne.s32.totalorder %v454, 0
        %vm457 = vmand %vm365, %vm455
        %vm458 = vmand %vm366, %vm456
        %v459 = vmul.f32 %v356, 0.01
        %v461 = vlaneseq
        %v462 = vshrl.u32 %v461, 7
        %v463 = vsub.s32 0, %v462
        %v464 = vrot.slane %v459, %v463
        %v465 = vlaneseq
        %v466 = vshrl.u32 %v465, 7
        %v467 = vsub.s32 1, %v466
        %v468 = vrot.slane %v459, %v467
        %v471 = vsub.f32 %v441, %v464
        %v472 = vsub.f32 %v442, %v468
        %v473 = vand.u32 2147483647, %v471
        %v474 = vand.u32 2147483647, %v472
        %v475 = vsel %vm457, %v473, 0.0
        %v476 = vsel %vm458, %v474, 0.0
        %v477 = vld [vmem:[#allocation2] sm:$0x3]
        %v480 = vcombine.low %v475, %v476
        %v482 = vunpack.c.l.s4 1966171168
        %v483 = vunpack.c.0.s8 %v482
        %v484 = vlaneseq
        %v485 = vshrl.u32 %v484, 7
        %v486 = vsub.s32 %v483, %v485
        %v487 = vrot.slane %v480, %v486
        %v489 = vunpack.c.l.s4 1966171168
        %v490 = vunpack.c.0.s8 %v489
        %v491 = vlaneseq
        %v492 = vshrl.u32 %v491, 7
        %v493 = vsub.s32 %v490, %v492
        %v494 = vrot.slane %v487, %v493
        %v496 = vadd.f32 %v477, %v494
        %v497 = vlaneseq
        %vm498 = vcmp.ge.s32.totalorder %v497, 0
        %vm499 = vcmp.lt.s32.totalorder %v497, 256
        %vm500 = vmand %vm498, %vm499
        %501 = vst.msk [vmem:[#allocation2] sm:$0x3] %vm500, %v496
        %v502 = vld [vmem:[#allocation3] sm:$0x3]
        %vm503 = vcmp.ne.s32.totalorder %v355, 255
        %v504 = vsel %vm503, 1, 0
        %v505 = vlaneseq
        %v506 = vshrl.u32 %v505, 7
        %v507 = vsub.s32 0, %v506
        %v508 = vrot.slane %v504, %v507
        %v509 = vlaneseq
        %v510 = vshrl.u32 %v509, 7
        %v511 = vsub.s32 1, %v510
        %v512 = vrot.slane %v504, %v511
        %vm513 = vcmp.ne.s32.totalorder %v508, 0
        %vm514 = vcmp.ne.s32.totalorder %v512, 0
        %vm515 = vmand %vm365, %vm513
        %vm516 = vmand %vm366, %vm514
        %v517 = vsel %vm515, 1, 0
        %v518 = vsel %vm516, 1, 0
        %v519 = vcvt.s32.f32 %v517
        %v520 = vcvt.s32.f32 %v518
        %v523 = vcombine.low %v519, %v520
        %v525 = vunpack.c.l.s4 1966171168
        %v526 = vunpack.c.0.s8 %v525
        %v527 = vlaneseq
        %v528 = vshrl.u32 %v527, 7
        %v529 = vsub.s32 %v526, %v528
        %v530 = vrot.slane %v523, %v529
        %v532 = vunpack.c.l.s4 1966171168
        %v533 = vunpack.c.0.s8 %v532
        %v534 = vlaneseq
        %v535 = vshrl.u32 %v534, 7
        %v536 = vsub.s32 %v533, %v535
        %v537 = vrot.slane %v530, %v536
        %v539 = vadd.f32 %v502, %v537
        %540 = vst.msk [vmem:[#allocation3] sm:$0x3] %vm500, %v539
        // Predicated region
        $region45: #{tpu_custom_call.1} parent=31 // pred_check
          %p541 = pneg %p344
        $region46: #{tpu_custom_call.1} parent=31 // pred_check_branch
          %543 = sbr.rel (%p541) target = $region48
        $region47: #{tpu_custom_call.1} parent=31 // pred_region
          %v544 = vld [vmem:[#allocation2] sm:$0x3]
          %v546 = vlaneseq
          %v547 = vshrl.u32 %v546, 7
          %v548 = vsub.s32 0, %v547
          %v549 = vrot.slane %v544, %v548
          %v550 = vlaneseq
          %v551 = vshrl.u32 %v550, 7
          %v552 = vsub.s32 1, %v551
          %v553 = vrot.slane %v544, %v552
          %vm556 = vcmask 1040384
          %v557 = vsel %vm556, %v549, 0.0
          %v558 = vsel %vm556, %v553, 0.0
          %v559 = vadd.f32 %v557, %v558
          %560 = vadd.xlane.f32.xlu0 %v559
          %v561 = vpop.xlane.xlu0 %560
          %v562 = vrot.slane %v561, 4
          %v563 = vadd.f32 %v561, %v562
          %v564 = vrot.slane %v563, 2
          %v565 = vadd.f32 %v563, %v564
          %v566 = vrot.slane %v565, 1
          %v567 = vadd.f32 %v565, %v566
          %s568 = vtos %v567
          %v569 = vstv %s568
          %570 = vst [vmem:[%s321] sm:$0xff] %v569
          %v571 = vld [vmem:[#allocation3] sm:$0x3]
          %v573 = vlaneseq
          %v574 = vshrl.u32 %v573, 7
          %v575 = vsub.s32 0, %v574
          %v576 = vrot.slane %v571, %v575
          %v577 = vlaneseq
          %v578 = vshrl.u32 %v577, 7
          %v579 = vsub.s32 1, %v578
          %v580 = vrot.slane %v571, %v579
          %v583 = vsel %vm556, %v576, 0.0
          %v584 = vsel %vm556, %v580, 0.0
          %v585 = vadd.f32 %v583, %v584
          %586 = vadd.xlane.f32.xlu0 %v585
          %v587 = vpop.xlane.xlu0 %586
          %v588 = vrot.slane %v587, 4
          %v589 = vadd.f32 %v587, %v588
          %v590 = vrot.slane %v589, 2
          %v591 = vadd.f32 %v589, %v590
          %v592 = vrot.slane %v591, 1
          %v593 = vadd.f32 %v591, %v592
          %s594 = vtos %v593
          %v595 = vstv %s594
          %596 = vst [vmem:[%s328] sm:$0xff] %v595
        $region48: #{tpu_custom_call.1} parent=31 // pred_fallthru
          _
        %s597 = sand.u32 %s147, 1
        %s598 = scalar_lea.sflag [#allocation6], %s597
        %s599 = sand.u32 %s147, 1
        %s600 = smul.addr %s599, 8
        %s601 = scalar_lea.vmem [#allocation9], %s600
        %s602 = sand.u32 %s175, 1
        %s603 = scalar_lea.sflag [#allocation11], %s602
        %s604 = sand.u32 %s175, 1
        %s605 = smul.addr %s604, 8
        %s606 = scalar_lea.vmem [#allocation10], %s605
        // Predicated region
        $region49: #{tpu_custom_call.1} parent=31 // pred_check
          %p607 = pneg %p157
        $region50: #{tpu_custom_call.1} parent=31 // pred_check_branch
          %609 = sbr.rel (%p607) target = $region52
        $region51: #{tpu_custom_call.1} parent=31 // pred_region
          %s611 = ssub.s32 128, 128
          %612 = vsyncadd %s598, %s611
          %s613 = sadd.s32 %s34, %s33
          %s614 = smul.addr %s613, 128
          %s615 = scalar_lea.hbm %s3, %s614
          %s617 = sshll.u32 %s601, 4
          %s618 = int_to_ptr.vmem [resolvable:$true] %s617
          %620 = dma.vmem_to_hbm [thread:$0]  %s618, 128, %s615, %s598
        $region52: #{tpu_custom_call.1} parent=31 // pred_fallthru
          _
        // Predicated region
        $region53: #{tpu_custom_call.1} parent=31 // pred_check
          %p621 = pneg %p185
        $region54: #{tpu_custom_call.1} parent=31 // pred_check_branch
          %623 = sbr.rel (%p621) target = $region56
        $region55: #{tpu_custom_call.1} parent=31 // pred_region
          %s625 = ssub.s32 128, 128
          %626 = vsyncadd %s603, %s625
          %s627 = sadd.s32 %s34, %s33
          %s628 = smul.addr %s627, 128
          %s629 = scalar_lea.hbm %s4, %s628
          %s631 = sshll.u32 %s606, 4
          %s632 = int_to_ptr.vmem [resolvable:$true] %s631
          %634 = dma.vmem_to_hbm [thread:$0]  %s632, 128, %s629, %s603
        $region56: #{tpu_custom_call.1} parent=31 // pred_fallthru
          _
      $region32: #{tpu_custom_call.1} parent=5 // pred_fallthru
        _
      %p635 = scmp.le.s32.totalorder 2, %s23
      // Predicated region
      $region57: #{tpu_custom_call.1} parent=5 // pred_check
        %p636 = pneg %p635
      $region58: #{tpu_custom_call.1} parent=5 // pred_check_branch
        %638 = sbr.rel (%p636) target = $region60
      $region59: #{tpu_custom_call.1} parent=5 // pred_region
        %s639 = ssub.s32 %s23, 2
        // Predicated region
        $region61: #{tpu_custom_call.1} parent=59 // pred_check
          %p640 = pneg %p163
        $region62: #{tpu_custom_call.1} parent=59 // pred_check_branch
          %642 = sbr.rel (%p640) target = $region64
        $region63: #{tpu_custom_call.1} parent=59 // pred_region
          %s643 = sand.u32 %s148, 1
          %s644 = scalar_lea.sflag [#allocation6], %s643
          %s645 = sand.u32 %s148, 1
          %s646 = smul.addr %s645, 8
          %s647 = scalar_lea.vmem [#allocation9], %s646
          %648 = dma.done %s644, 128
        $region64: #{tpu_custom_call.1} parent=59 // pred_fallthru
          _
        // Predicated region
        $region65: #{tpu_custom_call.1} parent=59 // pred_check
          %p649 = pneg %p191
        $region66: #{tpu_custom_call.1} parent=59 // pred_check_branch
          %651 = sbr.rel (%p649) target = $region68
        $region67: #{tpu_custom_call.1} parent=59 // pred_region
          %s652 = sand.u32 %s176, 1
          %s653 = scalar_lea.sflag [#allocation11], %s652
          %s654 = sand.u32 %s176, 1
          %s655 = smul.addr %s654, 8
          %s656 = scalar_lea.vmem [#allocation10], %s655
          %657 = dma.done %s653, 128
        $region68: #{tpu_custom_call.1} parent=59 // pred_fallthru
          _
      $region60: #{tpu_custom_call.1} parent=5 // pred_fallthru
        _
    $region6: #{tpu_custom_call.1} parent=1 // loop_footer
      %s27 = sadd.s32 1, %s23
    $region7: #{tpu_custom_call.1} parent=1 // loop_footer_branch
      %22 = sbr.rel target = $region3
    $region8: #{tpu_custom_call.1} parent=1 // loop_exit
      _
    %658 = vsyncpa [#allocation5], 1
    %s659 = scalar_lea.sflag [#allocation5], 1
    %660 = vsyncpa %s659, 1
    %661 = vsyncpa [#allocation8], 1
    %s662 = scalar_lea.sflag [#allocation8], 1
    %663 = vsyncpa %s662, 1
    %664 = vsyncpa [#allocation6], 1
    %s665 = scalar_lea.sflag [#allocation6], 1
    %666 = vsyncpa %s665, 1
    %667 = vsyncpa [#allocation11], 1
    %s668 = scalar_lea.sflag [#allocation11], 1
    %669 = vsyncpa %s668, 1

</llo_original>
